<compile_context>
chip_gen: v5e
topology: v5e:2x2
jax: 0.10.0
libtpu: 0.0.40
codegen_flags: <defaults>
</compile_context>

<pallas_src>
import functools

import jax
import jax.numpy as jnp
from jax.experimental import pallas as pl
from jax.experimental.pallas import tpu as pltpu

# ----------------------------------------------------------------------------
# Synthetic, deterministic "cfg" — PanopticHead has no learnable parameters.
# ----------------------------------------------------------------------------
THING_NUM_CLASSES = 4                      # cfg.MODEL.ROI_HEADS.NUM_CLASSES
STUFF_NUM_CLASSES = 3                      # SEM_SEG_HEAD.NUM_CLASSES - thing
SEM_SEG_NUM_CLASSES = STUFF_NUM_CLASSES + THING_NUM_CLASSES
MASK_SIZE = 8                              # ROI_MASK_HEAD.POOLER_RESOLUTION(=4) * 2
FEAT_STRIDE = 4                            # SEM_SEG_HEAD.COMMON_STRIDE
IGNORE_INDEX = 255                         # SOGNET.PANOPTIC.IGNORE_INDEX
PAN_LOSS_WEIGHT = 0.5                      # SOGNET.PANOPTIC.LOSS_WEIGHT


# ----------------------------------------------------------------------------
# Fused kernel: per-instance paste + crop + online-CE update; scalar loss at
# the last instance of each image.
# ----------------------------------------------------------------------------
def _panoptic_fused_kernel(cls_ref, boxes_ref, mask_ref, sem_ref, stuff_ref,
                           gt_ref, loss_ref, m_scr, se_scr, corr_scr,
                           *, mask_size, n_inst, n_stuff, ignore_index):
    b = pl.program_id(0)
    n = pl.program_id(1)
    M = mask_size
    H, W = gt_ref.shape[1], gt_ref.shape[2]
    f32 = jnp.float32

    # ---- per-instance box scalars (1-D SMEM layout: (b*N + n)*4 + {0..3}) ---
    base = (b * n_inst + n) * 4
    x0 = boxes_ref[base + 0]
    y0 = boxes_ref[base + 1]
    x1 = boxes_ref[base + 2]
    y1 = boxes_ref[base + 3]

    mask = mask_ref[0, 0]          # (M, M)  class-gathered by the DMA index_map
    sem_c = sem_ref[0, 0]          # (H, W)  class-gathered by the DMA index_map
    gt = gt_ref[0]                 # (H, W)  int32

    # ---- paste_mask_logit_in_image / _do_paste_mask -------------------------
    # grid_sample(bilinear, align_corners=False, padding=zeros) as separable
    # hat weights -> two MXU matmuls: (H,M) @ (M,M) @ (M,W).
    hc = jax.lax.broadcasted_iota(jnp.int32, (H, M), 0).astype(f32) + 0.5
    jc = jax.lax.broadcasted_iota(jnp.int32, (H, M), 1).astype(f32)
    iy = (hc - y0) / (y1 - y0) * M - 0.5
    wy = jnp.maximum(0.0, 1.0 - jnp.abs(iy - jc))                  # (H, M)

    ic = jax.lax.broadcasted_iota(jnp.int32, (M, W), 0).astype(f32)
    wc = jax.lax.broadcasted_iota(jnp.int32, (M, W), 1).astype(f32) + 0.5
    ix = (wc - x0) / (x1 - x0) * M - 0.5
    wxT = jnp.maximum(0.0, 1.0 - jnp.abs(ix - ic))                 # (M, W)

    pasted = jnp.dot(jnp.dot(wy, mask, preferred_element_type=f32), wxT,
                     preferred_element_type=f32)                   # (H, W)

    # ---- _crop_thing_logit_single: zero outside the rounded box ------------
    yy = jax.lax.broadcasted_iota(jnp.int32, (H, W), 0).astype(f32)
    xx = jax.lax.broadcasted_iota(jnp.int32, (H, W), 1).astype(f32)
    inside = ((yy >= jnp.round(y0)) & (yy < jnp.round(y1)) &
              (xx >= jnp.round(x0)) & (xx < jnp.round(x1)))
    t = pasted + jnp.where(inside, sem_c, 0.0)   # thing logit, channel S + n

    # ---- online (flash-style) logsumexp / CE accumulators ------------------
    @pl.when(n == 0)
    def _():
        # Fold the S stuff channels into the running stats.
        m = stuff_ref[0, 0]
        corr = jnp.where(gt == 0, stuff_ref[0, 0], 0.0)
        for s in range(1, n_stuff):
            ch = stuff_ref[0, s]
            m = jnp.maximum(m, ch)
            corr = corr + jnp.where(gt == s, ch, 0.0)
        se = jnp.exp(stuff_ref[0, 0] - m)
        for s in range(1, n_stuff):
            se = se + jnp.exp(stuff_ref[0, s] - m)
        m_scr[...] = m
        se_scr[...] = se
        corr_scr[...] = corr

    m_old = m_scr[...]
    m_new = jnp.maximum(m_old, t)
    se_scr[...] = se_scr[...] * jnp.exp(m_old - m_new) + jnp.exp(t - m_new)
    corr_scr[...] = corr_scr[...] + jnp.where(gt == n_stuff + n, t, 0.0)
    m_scr[...] = m_new

    # ---- last instance of this image: per-pixel CE, reduce to a scalar -----
    @pl.when(n == n_inst - 1)
    def _():
        valid = gt != ignore_index
        loss_px = jnp.where(
            valid, m_scr[...] + jnp.log(se_scr[...]) - corr_scr[...], 0.0)
        loss_sum = jnp.sum(loss_px)
        loss_ref[...] = jnp.broadcast_to(loss_sum, loss_ref.shape).astype(f32)


# ----------------------------------------------------------------------------
# PanopticHead.forward (training branch, relation_on=False)
# ----------------------------------------------------------------------------
def panoptic_head_forward_train(mask_logits_list, sem_seg_logits, gt_boxes_list,
                                gt_classes_list, gt_panoptic_list):
    B, _, H, W = sem_seg_logits.shape
    # torch.split(sem_seg_logits, [stuff, thing], dim=1)
    stuff_logits = sem_seg_logits[:, :STUFF_NUM_CLASSES]          # (B, S, H, W)
    thing_sem_logits = sem_seg_logits[:, STUFF_NUM_CLASSES:]      # (B, T, H, W)

    mask_logits = jnp.stack(mask_logits_list).astype(jnp.float32)  # (B, N, T, M, M)
    cls_idx = jnp.stack(gt_classes_list).astype(jnp.int32)         # (B, N)
    _, N, T, M, _ = mask_logits.shape
    cls_idx = jnp.clip(cls_idx, 0, T - 1)      # guard OOB class gather (e.g. -1)
    mask_flat = mask_logits.reshape(B, N * T, M, M)  # class gather in the DMA layer

    boxes = jnp.stack(gt_boxes_list).astype(jnp.float32) / float(FEAT_STRIDE)
    # guard against degenerate (zero-area) boxes — no-op for valid boxes
    boxes = boxes.at[..., 2].set(jnp.maximum(boxes[..., 2], boxes[..., 0] + 1e-4))
    boxes = boxes.at[..., 3].set(jnp.maximum(boxes[..., 3], boxes[..., 1] + 1e-4))
    boxes_flat = boxes.reshape(-1)             # 1-D SMEM layout, (4*B*N,)

    # F.interpolate(gt[None,None].float(), size=feat_size) (nearest) -> strided slice
    gt = jnp.stack(gt_panoptic_list).astype(jnp.int32)              # (B, Hi, Wi)
    Hi, Wi = gt.shape[-2:]
    if Hi % H == 0 and Wi % W == 0:
        gt_ds = gt[:, ::Hi // H, ::Wi // W]
    else:
        iy = jnp.floor(jnp.arange(H) * (Hi / H)).astype(jnp.int32)
        ix = jnp.floor(jnp.arange(W) * (Wi / W)).astype(jnp.int32)
        gt_ds = gt[:, iy][:, :, ix]

    kernel = functools.partial(
        _panoptic_fused_kernel, mask_size=M, n_inst=N,
        n_stuff=STUFF_NUM_CLASSES, ignore_index=IGNORE_INDEX)

    grid_spec = pltpu.PrefetchScalarGridSpec(
        num_scalar_prefetch=1,                 # cls_idx (B, N) -> SMEM
        grid=(B, N),
        in_specs=[
            pl.BlockSpec(memory_space=pltpu.MemorySpace.SMEM),      # boxes (4*B*N,)
            # class-gathered ROI mask logit: channel n*T + cls[b, n]
            pl.BlockSpec((1, 1, M, M),
                         lambda b, n, cls: (b, n * T + cls[b, n], 0, 0)),
            # class-gathered thing sem logit: channel cls[b, n]
            pl.BlockSpec((1, 1, H, W),
                         lambda b, n, cls: (b, cls[b, n], 0, 0)),
            pl.BlockSpec((1, STUFF_NUM_CLASSES, H, W),
                         lambda b, n, cls: (b, 0, 0, 0)),           # stuff sem
            pl.BlockSpec((1, H, W), lambda b, n, cls: (b, 0, 0)),   # gt (downsampled)
        ],
        out_specs=pl.BlockSpec((1, 8, 128), lambda b, n, cls: (b, 0, 0)),
        scratch_shapes=[pltpu.VMEM((H, W), jnp.float32),            # running max
                        pltpu.VMEM((H, W), jnp.float32),            # running sumexp
                        pltpu.VMEM((H, W), jnp.float32)],           # running "correct"
    )
    loss_tiles = pl.pallas_call(
        kernel,
        out_shape=jax.ShapeDtypeStruct((B, 8, 128), jnp.float32),
        grid_spec=grid_spec,
        compiler_params=pltpu.CompilerParams(
            dimension_semantics=("parallel", "arbitrary")),
    )(cls_idx, boxes_flat, mask_flat, thing_sem_logits, stuff_logits, gt_ds)

    # CrossEntropyLoss(ignore_index) per image, then reduce_loss('mean') * weight
    loss_sum = loss_tiles[:, 0, 0]                                   # (B,)
    valid_cnt = jnp.sum((gt_ds != IGNORE_INDEX).astype(jnp.float32), axis=(1, 2))
    per_image_loss = loss_sum / jnp.maximum(valid_cnt, 1.0)          # NaN guard
    loss_panoptic = jnp.mean(per_image_loss) * PAN_LOSS_WEIGHT
    return None, {"loss_panoptic": loss_panoptic}


if __name__ == "__main__":
    key = jax.random.PRNGKey(0)
    B, N = 2, 5
    H = W = 16
    IMG_H, IMG_W = H * FEAT_STRIDE, W * FEAT_STRIDE
    ks = list(jax.random.split(key, 16))

    sem_seg_logits = jax.random.normal(ks[0], (B, SEM_SEG_NUM_CLASSES, H, W), jnp.float32)
    mask_logits_list = [
        jax.random.normal(ks[1 + b], (N, THING_NUM_CLASSES, MASK_SIZE, MASK_SIZE), jnp.float32)
        for b in range(B)
    ]
    gt_classes_list = [
        jax.random.randint(ks[3 + b], (N,), 0, THING_NUM_CLASSES, jnp.int32) for b in range(B)
    ]
    gt_boxes_list = []
    for b in range(B):
        kx, ky, kw, kh = jax.random.split(ks[5 + b], 4)
        x1 = jax.random.uniform(kx, (N,), minval=0.0, maxval=IMG_W - 24.0)
        y1 = jax.random.uniform(ky, (N,), minval=0.0, maxval=IMG_H - 24.0)
        w = jax.random.uniform(kw, (N,), minval=8.0, maxval=24.0)
        h = jax.random.uniform(kh, (N,), minval=8.0, maxval=24.0)
        gt_boxes_list.append(jnp.stack([x1, y1, x1 + w, y1 + h], axis=1))
    gt_panoptic_list = []
    for b in range(B):
        ka, kb = jax.random.split(ks[7 + b])
        gtp = jax.random.randint(ka, (IMG_H, IMG_W), 0, STUFF_NUM_CLASSES + N, jnp.int32)
        ignore = jax.random.uniform(kb, (IMG_H, IMG_W)) < 0.1
        gt_panoptic_list.append(jnp.where(ignore, IGNORE_INDEX, gtp))

    _, losses = panoptic_head_forward_train(
        mask_logits_list, sem_seg_logits, gt_boxes_list, gt_classes_list, gt_panoptic_list)
    jax.block_until_ready(losses["loss_panoptic"])
    print("KERNEL_OK")
</pallas_src>

<mosaic_0001>
module attributes {stable_mosaic.version = 11 : i64} {
  func.func @_panoptic_fused_kernel(%arg0: i32, %arg1: i32, %arg2: memref<2x5xi32, #tpu.memory_space<smem>>, %arg3: memref<40xf32, #tpu.memory_space<smem>>, %arg4: memref<1x1x8x8xf32, #tpu.memory_space<vmem>>, %arg5: memref<1x1x16x16xf32, #tpu.memory_space<vmem>>, %arg6: memref<1x3x16x16xf32, #tpu.memory_space<vmem>>, %arg7: memref<1x16x16xi32, #tpu.memory_space<vmem>>, %arg8: memref<1x8x128xf32, #tpu.memory_space<vmem>>, %arg9: memref<16x16xf32, #tpu.memory_space<vmem>>, %arg10: memref<16x16xf32, #tpu.memory_space<vmem>>, %arg11: memref<16x16xf32, #tpu.memory_space<vmem>>) attributes {dimension_semantics = [#tpu.dimension_semantics<parallel>, #tpu.dimension_semantics<arbitrary>], iteration_bounds = array<i64: 2, 5>, scalar_prefetch = 1 : i64, scratch_operands = 3 : i64, tpu.core_type = #tpu.core_type<tc>, window_params = [{transform_indices = @transform_0, window_bounds = array<i64: 40>}, {transform_indices = @transform_1, window_bounds = array<i64: 1, 1, 8, 8>}, {transform_indices = @transform_2, window_bounds = array<i64: 1, 1, 16, 16>}, {transform_indices = @transform_3, window_bounds = array<i64: 1, 3, 16, 16>}, {transform_indices = @transform_4, window_bounds = array<i64: 1, 16, 16>}, {transform_indices = @transform_5, window_bounds = array<i64: 1, 8, 128>}]} {
    %c5_i32 = arith.constant 5 : i32
    %0 = arith.muli %arg0, %c5_i32 : i32
    %1 = arith.addi %0, %arg1 : i32
    %c4_i32 = arith.constant 4 : i32
    %2 = arith.muli %1, %c4_i32 : i32
    %c0_i32 = arith.constant 0 : i32
    %3 = arith.addi %2, %c0_i32 : i32
    %4 = arith.index_cast %3 : i32 to index
    %5 = memref.load %arg3[%4] : memref<40xf32, #tpu.memory_space<smem>>
    %c1_i32 = arith.constant 1 : i32
    %6 = arith.addi %2, %c1_i32 : i32
    %7 = arith.index_cast %6 : i32 to index
    %8 = memref.load %arg3[%7] : memref<40xf32, #tpu.memory_space<smem>>
    %c2_i32 = arith.constant 2 : i32
    %9 = arith.addi %2, %c2_i32 : i32
    %10 = arith.index_cast %9 : i32 to index
    %11 = memref.load %arg3[%10] : memref<40xf32, #tpu.memory_space<smem>>
    %c3_i32 = arith.constant 3 : i32
    %12 = arith.addi %2, %c3_i32 : i32
    %13 = arith.index_cast %12 : i32 to index
    %14 = memref.load %arg3[%13] : memref<40xf32, #tpu.memory_space<smem>>
    %c0 = arith.constant 0 : index
    %c0_0 = arith.constant 0 : index
    %c0_1 = arith.constant 0 : index
    %c0_2 = arith.constant 0 : index
    %15 = vector.load %arg4[%c0, %c0_0, %c0_1, %c0_2] : memref<1x1x8x8xf32, #tpu.memory_space<vmem>>, vector<1x1x8x8xf32>
    %16 = vector.shape_cast %15 : vector<1x1x8x8xf32> to vector<8x8xf32>
    %c0_3 = arith.constant 0 : index
    %c0_4 = arith.constant 0 : index
    %c0_5 = arith.constant 0 : index
    %c0_6 = arith.constant 0 : index
    %17 = vector.load %arg5[%c0_3, %c0_4, %c0_5, %c0_6] : memref<1x1x16x16xf32, #tpu.memory_space<vmem>>, vector<1x1x16x16xf32>
    %18 = vector.shape_cast %17 : vector<1x1x16x16xf32> to vector<16x16xf32>
    %c0_7 = arith.constant 0 : index
    %c0_8 = arith.constant 0 : index
    %c0_9 = arith.constant 0 : index
    %19 = vector.load %arg7[%c0_7, %c0_8, %c0_9] : memref<1x16x16xi32, #tpu.memory_space<vmem>>, vector<1x16x16xi32>
    %20 = vector.shape_cast %19 : vector<1x16x16xi32> to vector<16x16xi32>
    %21 = tpu.iota {dimensions = array<i32: 0>} : vector<16x8xi32>
    %22 = arith.sitofp %21 : vector<16x8xi32> to vector<16x8xf32>
    %cst = arith.constant 5.000000e-01 : f32
    %23 = vector.broadcast %cst : f32 to vector<16x8xf32>
    %24 = arith.addf %22, %23 : vector<16x8xf32>
    %25 = tpu.iota {dimensions = array<i32: 1>} : vector<16x8xi32>
    %26 = arith.sitofp %25 : vector<16x8xi32> to vector<16x8xf32>
    %27 = vector.broadcast %8 : f32 to vector<16x8xf32>
    %28 = arith.subf %24, %27 : vector<16x8xf32>
    %29 = arith.subf %14, %8 : f32
    %30 = vector.broadcast %29 : f32 to vector<16x8xf32>
    %31 = arith.divf %28, %30 : vector<16x8xf32>
    %cst_10 = arith.constant 8.000000e+00 : f32
    %32 = vector.broadcast %cst_10 : f32 to vector<16x8xf32>
    %33 = arith.mulf %31, %32 : vector<16x8xf32>
    %cst_11 = arith.constant 5.000000e-01 : f32
    %34 = vector.broadcast %cst_11 : f32 to vector<16x8xf32>
    %35 = arith.subf %33, %34 : vector<16x8xf32>
    %36 = arith.subf %35, %26 : vector<16x8xf32>
    %37 = math.absf %36 : vector<16x8xf32>
    %cst_12 = arith.constant 1.000000e+00 : f32
    %38 = vector.broadcast %cst_12 : f32 to vector<16x8xf32>
    %39 = arith.subf %38, %37 : vector<16x8xf32>
    %cst_13 = arith.constant 0.000000e+00 : f32
    %40 = vector.broadcast %cst_13 : f32 to vector<16x8xf32>
    %41 = arith.maximumf %40, %39 : vector<16x8xf32>
    %42 = tpu.iota {dimensions = array<i32: 0>} : vector<8x16xi32>
    %43 = arith.sitofp %42 : vector<8x16xi32> to vector<8x16xf32>
    %44 = tpu.iota {dimensions = array<i32: 1>} : vector<8x16xi32>
    %45 = arith.sitofp %44 : vector<8x16xi32> to vector<8x16xf32>
    %cst_14 = arith.constant 5.000000e-01 : f32
    %46 = vector.broadcast %cst_14 : f32 to vector<8x16xf32>
    %47 = arith.addf %45, %46 : vector<8x16xf32>
    %48 = vector.broadcast %5 : f32 to vector<8x16xf32>
    %49 = arith.subf %47, %48 : vector<8x16xf32>
    %50 = arith.subf %11, %5 : f32
    %51 = vector.broadcast %50 : f32 to vector<8x16xf32>
    %52 = arith.divf %49, %51 : vector<8x16xf32>
    %cst_15 = arith.constant 8.000000e+00 : f32
    %53 = vector.broadcast %cst_15 : f32 to vector<8x16xf32>
    %54 = arith.mulf %52, %53 : vector<8x16xf32>
    %cst_16 = arith.constant 5.000000e-01 : f32
    %55 = vector.broadcast %cst_16 : f32 to vector<8x16xf32>
    %56 = arith.subf %54, %55 : vector<8x16xf32>
    %57 = arith.subf %56, %43 : vector<8x16xf32>
    %58 = math.absf %57 : vector<8x16xf32>
    %cst_17 = arith.constant 1.000000e+00 : f32
    %59 = vector.broadcast %cst_17 : f32 to vector<8x16xf32>
    %60 = arith.subf %59, %58 : vector<8x16xf32>
    %cst_18 = arith.constant 0.000000e+00 : f32
    %61 = vector.broadcast %cst_18 : f32 to vector<8x16xf32>
    %62 = arith.maximumf %61, %60 : vector<8x16xf32>
    %cst_19 = arith.constant dense<0.000000e+00> : vector<16x8xf32>
    %63 = tpu.matmul %41, %16, %cst_19 {dimension_numbers = #tpu.dot_dimension_numbers<[1], [0], [0], [1], [0, 0, 1, 1], [], []>} : vector<16x8xf32>, vector<8x8xf32>, vector<16x8xf32> -> vector<16x8xf32>
    %cst_20 = arith.constant dense<0.000000e+00> : vector<16x16xf32>
    %64 = tpu.matmul %63, %62, %cst_20 {dimension_numbers = #tpu.dot_dimension_numbers<[1], [0], [0], [1], [0, 0, 1, 1], [], []>} : vector<16x8xf32>, vector<8x16xf32>, vector<16x16xf32> -> vector<16x16xf32>
    %65 = tpu.iota {dimensions = array<i32: 0>} : vector<16x16xi32>
    %66 = arith.sitofp %65 : vector<16x16xi32> to vector<16x16xf32>
    %67 = tpu.iota {dimensions = array<i32: 1>} : vector<16x16xi32>
    %68 = arith.sitofp %67 : vector<16x16xi32> to vector<16x16xf32>
    %69 = math.roundeven %8 : f32
    %70 = vector.broadcast %69 : f32 to vector<16x16xf32>
    %71 = arith.cmpf oge, %66, %70 : vector<16x16xf32>
    %72 = math.roundeven %14 : f32
    %73 = vector.broadcast %72 : f32 to vector<16x16xf32>
    %74 = arith.cmpf olt, %66, %73 : vector<16x16xf32>
    %75 = arith.andi %71, %74 : vector<16x16xi1>
    %76 = math.roundeven %5 : f32
    %77 = vector.broadcast %76 : f32 to vector<16x16xf32>
    %78 = arith.cmpf oge, %68, %77 : vector<16x16xf32>
    %79 = arith.andi %75, %78 : vector<16x16xi1>
    %80 = math.roundeven %11 : f32
    %81 = vector.broadcast %80 : f32 to vector<16x16xf32>
    %82 = arith.cmpf olt, %68, %81 : vector<16x16xf32>
    %83 = arith.andi %79, %82 : vector<16x16xi1>
    %cst_21 = arith.constant 0.000000e+00 : f32
    %84 = vector.broadcast %cst_21 : f32 to vector<16x16xf32>
    %85 = arith.select %83, %18, %84 : vector<16x16xi1>, vector<16x16xf32>
    %86 = arith.addf %64, %85 : vector<16x16xf32>
    %c0_i32_22 = arith.constant 0 : i32
    %87 = arith.cmpi eq, %arg1, %c0_i32_22 : i32
    %88 = arith.extui %87 : i1 to i32
    %c0_i32_23 = arith.constant 0 : i32
    %89 = arith.cmpi ne, %88, %c0_i32_23 : i32
    scf.if %89 {
      %c0_40 = arith.constant 0 : index
      %c0_41 = arith.constant 0 : index
      %c0_42 = arith.constant 0 : index
      %c0_43 = arith.constant 0 : index
      %112 = vector.load %arg6[%c0_40, %c0_41, %c0_42, %c0_43] : memref<1x3x16x16xf32, #tpu.memory_space<vmem>>, vector<1x1x16x16xf32>
      %113 = vector.shape_cast %112 : vector<1x1x16x16xf32> to vector<16x16xf32>
      %c0_i32_44 = arith.constant 0 : i32
      %114 = vector.broadcast %c0_i32_44 : i32 to vector<16x16xi32>
      %115 = arith.cmpi eq, %20, %114 : vector<16x16xi32>
      %c0_45 = arith.constant 0 : index
      %c0_46 = arith.constant 0 : index
      %c0_47 = arith.constant 0 : index
      %c0_48 = arith.constant 0 : index
      %116 = vector.load %arg6[%c0_45, %c0_46, %c0_47, %c0_48] : memref<1x3x16x16xf32, #tpu.memory_space<vmem>>, vector<1x1x16x16xf32>
      %117 = vector.shape_cast %116 : vector<1x1x16x16xf32> to vector<16x16xf32>
      %cst_49 = arith.constant 0.000000e+00 : f32
      %118 = vector.broadcast %cst_49 : f32 to vector<16x16xf32>
      %119 = arith.select %115, %117, %118 : vector<16x16xi1>, vector<16x16xf32>
      %c0_50 = arith.constant 0 : index
      %c1 = arith.constant 1 : index
      %c0_51 = arith.constant 0 : index
      %c0_52 = arith.constant 0 : index
      %120 = vector.load %arg6[%c0_50, %c1, %c0_51, %c0_52] : memref<1x3x16x16xf32, #tpu.memory_space<vmem>>, vector<1x1x16x16xf32>
      %121 = vector.shape_cast %120 : vector<1x1x16x16xf32> to vector<16x16xf32>
      %122 = arith.maximumf %113, %121 : vector<16x16xf32>
      %c1_i32_53 = arith.constant 1 : i32
      %123 = vector.broadcast %c1_i32_53 : i32 to vector<16x16xi32>
      %124 = arith.cmpi eq, %20, %123 : vector<16x16xi32>
      %cst_54 = arith.constant 0.000000e+00 : f32
      %125 = vector.broadcast %cst_54 : f32 to vector<16x16xf32>
      %126 = arith.select %124, %121, %125 : vector<16x16xi1>, vector<16x16xf32>
      %127 = arith.addf %119, %126 : vector<16x16xf32>
      %c0_55 = arith.constant 0 : index
      %c2 = arith.constant 2 : index
      %c0_56 = arith.constant 0 : index
      %c0_57 = arith.constant 0 : index
      %128 = vector.load %arg6[%c0_55, %c2, %c0_56, %c0_57] : memref<1x3x16x16xf32, #tpu.memory_space<vmem>>, vector<1x1x16x16xf32>
      %129 = vector.shape_cast %128 : vector<1x1x16x16xf32> to vector<16x16xf32>
      %130 = arith.maximumf %122, %129 : vector<16x16xf32>
      %c2_i32_58 = arith.constant 2 : i32
      %131 = vector.broadcast %c2_i32_58 : i32 to vector<16x16xi32>
      %132 = arith.cmpi eq, %20, %131 : vector<16x16xi32>
      %cst_59 = arith.constant 0.000000e+00 : f32
      %133 = vector.broadcast %cst_59 : f32 to vector<16x16xf32>
      %134 = arith.select %132, %129, %133 : vector<16x16xi1>, vector<16x16xf32>
      %135 = arith.addf %127, %134 : vector<16x16xf32>
      %c0_60 = arith.constant 0 : index
      %c0_61 = arith.constant 0 : index
      %c0_62 = arith.constant 0 : index
      %c0_63 = arith.constant 0 : index
      %136 = vector.load %arg6[%c0_60, %c0_61, %c0_62, %c0_63] : memref<1x3x16x16xf32, #tpu.memory_space<vmem>>, vector<1x1x16x16xf32>
      %137 = vector.shape_cast %136 : vector<1x1x16x16xf32> to vector<16x16xf32>
      %138 = arith.subf %137, %130 : vector<16x16xf32>
      %139 = math.exp %138 : vector<16x16xf32>
      %c0_64 = arith.constant 0 : index
      %c1_65 = arith.constant 1 : index
      %c0_66 = arith.constant 0 : index
      %c0_67 = arith.constant 0 : index
      %140 = vector.load %arg6[%c0_64, %c1_65, %c0_66, %c0_67] : memref<1x3x16x16xf32, #tpu.memory_space<vmem>>, vector<1x1x16x16xf32>
      %141 = vector.shape_cast %140 : vector<1x1x16x16xf32> to vector<16x16xf32>
      %142 = arith.subf %141, %130 : vector<16x16xf32>
      %143 = math.exp %142 : vector<16x16xf32>
      %144 = arith.addf %139, %143 : vector<16x16xf32>
      %c0_68 = arith.constant 0 : index
      %c2_69 = arith.constant 2 : index
      %c0_70 = arith.constant 0 : index
      %c0_71 = arith.constant 0 : index
      %145 = vector.load %arg6[%c0_68, %c2_69, %c0_70, %c0_71] : memref<1x3x16x16xf32, #tpu.memory_space<vmem>>, vector<1x1x16x16xf32>
      %146 = vector.shape_cast %145 : vector<1x1x16x16xf32> to vector<16x16xf32>
      %147 = arith.subf %146, %130 : vector<16x16xf32>
      %148 = math.exp %147 : vector<16x16xf32>
      %149 = arith.addf %144, %148 : vector<16x16xf32>
      %c0_72 = arith.constant 0 : index
      %c0_73 = arith.constant 0 : index
      %150 = vector.load %arg9[%c0_72, %c0_73] : memref<16x16xf32, #tpu.memory_space<vmem>>, vector<16x16xf32>
      tpu.vector_store %arg9[%c0_72, %c0_73], %130 {strides = array<i32>} : memref<16x16xf32, #tpu.memory_space<vmem>>, vector<16x16xf32>,
      %c0_74 = arith.constant 0 : index
      %c0_75 = arith.constant 0 : index
      %151 = vector.load %arg10[%c0_74, %c0_75] : memref<16x16xf32, #tpu.memory_space<vmem>>, vector<16x16xf32>
      tpu.vector_store %arg10[%c0_74, %c0_75], %149 {strides = array<i32>} : memref<16x16xf32, #tpu.memory_space<vmem>>, vector<16x16xf32>,
      %c0_76 = arith.constant 0 : index
      %c0_77 = arith.constant 0 : index
      %152 = vector.load %arg11[%c0_76, %c0_77] : memref<16x16xf32, #tpu.memory_space<vmem>>, vector<16x16xf32>
      tpu.vector_store %arg11[%c0_76, %c0_77], %135 {strides = array<i32>} : memref<16x16xf32, #tpu.memory_space<vmem>>, vector<16x16xf32>,
    } else {
    }
    %c0_24 = arith.constant 0 : index
    %c0_25 = arith.constant 0 : index
    %90 = vector.load %arg9[%c0_24, %c0_25] : memref<16x16xf32, #tpu.memory_space<vmem>>, vector<16x16xf32>
    %91 = arith.maximumf %90, %86 : vector<16x16xf32>
    %c0_26 = arith.constant 0 : index
    %c0_27 = arith.constant 0 : index
    %92 = vector.load %arg10[%c0_26, %c0_27] : memref<16x16xf32, #tpu.memory_space<vmem>>, vector<16x16xf32>
    %93 = arith.subf %90, %91 : vector<16x16xf32>
    %94 = math.exp %93 : vector<16x16xf32>
    %95 = arith.mulf %92, %94 : vector<16x16xf32>
    %96 = arith.subf %86, %91 : vector<16x16xf32>
    %97 = math.exp %96 : vector<16x16xf32>
    %98 = arith.addf %95, %97 : vector<16x16xf32>
    %c0_28 = arith.constant 0 : index
    %c0_29 = arith.constant 0 : index
    %99 = vector.load %arg10[%c0_28, %c0_29] : memref<16x16xf32, #tpu.memory_space<vmem>>, vector<16x16xf32>
    tpu.vector_store %arg10[%c0_28, %c0_29], %98 {strides = array<i32>} : memref<16x16xf32, #tpu.memory_space<vmem>>, vector<16x16xf32>,
    %c0_30 = arith.constant 0 : index
    %c0_31 = arith.constant 0 : index
    %100 = vector.load %arg11[%c0_30, %c0_31] : memref<16x16xf32, #tpu.memory_space<vmem>>, vector<16x16xf32>
    %c3_i32_32 = arith.constant 3 : i32
    %101 = arith.addi %c3_i32_32, %arg1 : i32
    %102 = vector.broadcast %101 : i32 to vector<16x16xi32>
    %103 = arith.cmpi eq, %20, %102 : vector<16x16xi32>
    %cst_33 = arith.constant 0.000000e+00 : f32
    %104 = vector.broadcast %cst_33 : f32 to vector<16x16xf32>
    %105 = arith.select %103, %86, %104 : vector<16x16xi1>, vector<16x16xf32>
    %106 = arith.addf %100, %105 : vector<16x16xf32>
    %c0_34 = arith.constant 0 : index
    %c0_35 = arith.constant 0 : index
    %107 = vector.load %arg11[%c0_34, %c0_35] : memref<16x16xf32, #tpu.memory_space<vmem>>, vector<16x16xf32>
    tpu.vector_store %arg11[%c0_34, %c0_35], %106 {strides = array<i32>} : memref<16x16xf32, #tpu.memory_space<vmem>>, vector<16x16xf32>,
    %c0_36 = arith.constant 0 : index
    %c0_37 = arith.constant 0 : index
    %108 = vector.load %arg9[%c0_36, %c0_37] : memref<16x16xf32, #tpu.memory_space<vmem>>, vector<16x16xf32>
    tpu.vector_store %arg9[%c0_36, %c0_37], %91 {strides = array<i32>} : memref<16x16xf32, #tpu.memory_space<vmem>>, vector<16x16xf32>,
    %c4_i32_38 = arith.constant 4 : i32
    %109 = arith.cmpi eq, %arg1, %c4_i32_38 : i32
    %110 = arith.extui %109 : i1 to i32
    %c0_i32_39 = arith.constant 0 : i32
    %111 = arith.cmpi ne, %110, %c0_i32_39 : i32
    scf.if %111 {
      %c255_i32 = arith.constant 255 : i32
      %112 = vector.broadcast %c255_i32 : i32 to vector<16x16xi32>
      %113 = arith.cmpi ne, %20, %112 : vector<16x16xi32>
      %c0_40 = arith.constant 0 : index
      %c0_41 = arith.constant 0 : index
      %114 = vector.load %arg9[%c0_40, %c0_41] : memref<16x16xf32, #tpu.memory_space<vmem>>, vector<16x16xf32>
      %c0_42 = arith.constant 0 : index
      %c0_43 = arith.constant 0 : index
      %115 = vector.load %arg10[%c0_42, %c0_43] : memref<16x16xf32, #tpu.memory_space<vmem>>, vector<16x16xf32>
      %116 = math.log %115 : vector<16x16xf32>
      %117 = arith.addf %114, %116 : vector<16x16xf32>
      %c0_44 = arith.constant 0 : index
      %c0_45 = arith.constant 0 : index
      %118 = vector.load %arg11[%c0_44, %c0_45] : memref<16x16xf32, #tpu.memory_space<vmem>>, vector<16x16xf32>
      %119 = arith.subf %117, %118 : vector<16x16xf32>
      %cst_46 = arith.constant 0.000000e+00 : f32
      %120 = vector.broadcast %cst_46 : f32 to vector<16x16xf32>
      %121 = arith.select %113, %119, %120 : vector<16x16xi1>, vector<16x16xf32>
      %122 = vector.shape_cast %121 : vector<16x16xf32> to vector<1x16x16xf32>
      %cst_47 = arith.constant dense<0.000000e+00> : vector<1xf32>
      %123 = vector.multi_reduction <add>, %122, %cst_47 [1, 2] : vector<1x16x16xf32> to vector<1xf32>
      %124 = vector.shape_cast %123 : vector<1xf32> to vector<1x1x1xf32>
      %125 = vector.extract %124[0, 0, 0] : f32 from vector<1x1x1xf32>
      %126 = vector.broadcast %125 : f32 to vector<1x8x128xf32>
      %c0_48 = arith.constant 0 : index
      %c0_49 = arith.constant 0 : index
      %c0_50 = arith.constant 0 : index
      %127 = vector.load %arg8[%c0_48, %c0_49, %c0_50] : memref<1x8x128xf32, #tpu.memory_space<vmem>>, vector<1x8x128xf32>
      tpu.vector_store %arg8[%c0_48, %c0_49, %c0_50], %126 {strides = array<i32>} : memref<1x8x128xf32, #tpu.memory_space<vmem>>, vector<1x8x128xf32>,
    } else {
    }
    return
  }
  func.func @transform_0(%arg0: i32, %arg1: i32, %arg2: memref<2x5xi32, #tpu.memory_space<smem>>) -> i32 {
    %c0_i32 = arith.constant 0 : i32
    %c0_i32_0 = arith.constant 0 : i32
    return %c0_i32 : i32
  }
  func.func @transform_1(%arg0: i32, %arg1: i32, %arg2: memref<2x5xi32, #tpu.memory_space<smem>>) -> (i32, i32, i32, i32) {
    %c4_i32 = arith.constant 4 : i32
    %0 = arith.muli %arg1, %c4_i32 : i32
    %1 = arith.index_cast %arg0 : i32 to index
    %2 = arith.index_cast %arg1 : i32 to index
    %3 = memref.load %arg2[%1, %2] : memref<2x5xi32, #tpu.memory_space<smem>>
    %4 = arith.addi %0, %3 : i32
    %c0_i32 = arith.constant 0 : i32
    %c0_i32_0 = arith.constant 0 : i32
    %c0_i32_1 = arith.constant 0 : i32
    return %arg0, %4, %c0_i32, %c0_i32_0 : i32, i32, i32, i32
  }
  func.func @transform_2(%arg0: i32, %arg1: i32, %arg2: memref<2x5xi32, #tpu.memory_space<smem>>) -> (i32, i32, i32, i32) {
    %0 = arith.index_cast %arg0 : i32 to index
    %1 = arith.index_cast %arg1 : i32 to index
    %2 = memref.load %arg2[%0, %1] : memref<2x5xi32, #tpu.memory_space<smem>>
    %c0_i32 = arith.constant 0 : i32
    %c0_i32_0 = arith.constant 0 : i32
    %c0_i32_1 = arith.constant 0 : i32
    return %arg0, %2, %c0_i32, %c0_i32_0 : i32, i32, i32, i32
  }
  func.func @transform_3(%arg0: i32, %arg1: i32, %arg2: memref<2x5xi32, #tpu.memory_space<smem>>) -> (i32, i32, i32, i32) {
    %c0_i32 = arith.constant 0 : i32
    %c0_i32_0 = arith.constant 0 : i32
    %c0_i32_1 = arith.constant 0 : i32
    %c0_i32_2 = arith.constant 0 : i32
    return %arg0, %c0_i32, %c0_i32_0, %c0_i32_1 : i32, i32, i32, i32
  }
  func.func @transform_4(%arg0: i32, %arg1: i32, %arg2: memref<2x5xi32, #tpu.memory_space<smem>>) -> (i32, i32, i32) {
    %c0_i32 = arith.constant 0 : i32
    %c0_i32_0 = arith.constant 0 : i32
    %c0_i32_1 = arith.constant 0 : i32
    return %arg0, %c0_i32, %c0_i32_0 : i32, i32, i32
  }
  func.func @transform_5(%arg0: i32, %arg1: i32, %arg2: memref<2x5xi32, #tpu.memory_space<smem>>) -> (i32, i32, i32) {
    %c0_i32 = arith.constant 0 : i32
    %c0_i32_0 = arith.constant 0 : i32
    %c0_i32_1 = arith.constant 0 : i32
    return %arg0, %c0_i32, %c0_i32_0 : i32, i32, i32
  }
}

</mosaic_0001>

<llo_original>
// kernel: tpu_custom_call.1
$region0: #{tpu_custom_call.1}
  #allocation0 [shape = 'u32[]', space=smem, size = 0x4, offset = 0x4, fixed_abs, tag = 'smem constant byte address 0x4 - core index']
  #allocation1 [shape = 'u32[72,128]{1,0:T(1,128)}', space=vmem, size = 0x9000, scoped, tag = 'internal scratch']
  #allocation2 [shape = 'f32[16,16]{1,0:T(8,128)}', space=vmem, size = 0x2000, scoped, tag = 'scratch operand']
  #allocation3 [shape = 'f32[16,16]{1,0:T(8,128)}', space=vmem, size = 0x2000, scoped, tag = 'scratch operand']
  #allocation4 [shape = 'f32[16,16]{1,0:T(8,128)}', space=vmem, size = 0x2000, scoped, tag = 'scratch operand']
  #allocation5 [shape = 's32[1]{0}', space=sflag, size = 0x4, scoped, tag = 'scoped memory for tpu_custom_call.1']
  #allocation6 [shape = 'u8[1024]{0}', space=smem, size = 0x400, scoped, tag = 'prefetched SMEM operand 0']
  %s0 = inlined_call_operand.vmem [shape: s32[2,5], index: 0, kind: input, shape index: {}]
  %s1 = inlined_call_operand.vmem [shape: f32[40], index: 1, kind: input, shape index: {}]
  %s2 = inlined_call_operand.vmem [shape: f32[2,20,8,8], index: 2, kind: input, shape index: {}]
  %s3 = inlined_call_operand.vmem [shape: f32[2,4,16,16], index: 3, kind: input, shape index: {}]
  %s4 = inlined_call_operand.vmem [shape: f32[2,3,16,16], index: 4, kind: input, shape index: {}]
  %s5 = inlined_call_operand.vmem [shape: s32[2,16,16], index: 5, kind: input, shape index: {}]
  %s6 = inlined_call_operand.hbm [shape: f32[2,8,128], index: 6, kind: output, shape index: {}]
  %s7 = sld [smem:[#allocation0]]
  $region65: #{tpu_custom_call.1} parent=0
    _
  %s9 = ssub.s32 1, %s7
  %s10 = scalar_select 0, %s9, %s7
  %s12 = sshll.u32 %s0, 4
  %s13 = int_to_ptr.vmem [resolvable:$true] %s12
  %15 = dma.vmem_to_smem %s13, 32, [#allocation6], [#allocation5]
  %17 = dma.done [#allocation5], 32
  %18 = sfence
  $region1: #{tpu_custom_call.1} parent=0
    #allocation7 [shape = 'u8[512]{0}', space=smem, size = 0x200, scoped, tag = 'input window, operand 1, single buffered']
    #allocation8 [shape = 's32[2]{0}', space=sflag, size = 0x8, scoped, tag = 'scoped memory for tpu_custom_call.1']
    #allocation9 [shape = 's32[2]{0}', space=sflag, size = 0x8, scoped, tag = 'scoped memory for tpu_custom_call.1']
    #allocation10 [shape = 'u8[8192]{0}', space=vmem, size = 0x2000, scoped, tag = 'output window, operand 0']
    %19 = vsyncpa [#allocation9], 0
    %20 = vsyncpa [#allocation8], 0
    %s21 = scalar_lea.sflag [#allocation8], 1
    %22 = vsyncpa %s21, 0
    loop: start=0, step=1, limit=12
    $region2: #{tpu_custom_call.1} parent=1 // loop_pre_header
      _
    $region3: #{tpu_custom_call.1} parent=1 // loop_header
      %s24 = sphi 0, %s28
      %p25 = scmp.ge.s32.totalorder %s24, 12
      %s31 = sphi 0, %s43
      %s32 = sphi 0, %s39
      %s33 = sphi 0, %s31
      %s34 = sphi 0, %s32
      %s35 = sphi 0, %s33
      %s36 = sphi 0, %s34
      %s44 = sphi 0, %s44
      %s46 = sphi 0, %s44
      %s47 = sphi 0, %s46
      %s61 = sphi 0, %s47
      %s89 = sphi 0, %s91
      %s92 = sphi 0, %s89
      %s93 = sphi 0, %s92
      %s109 = sphi 0, %s93
      %s133 = sphi 0, %s135
      %s136 = sphi 0, %s133
      %s137 = sphi 0, %s136
      %s153 = sphi 0, %s137
      %s159 = sphi 0, %s161
      %s162 = sphi 0, %s159
      %s163 = sphi 0, %s162
      %s179 = sphi 0, %s163
      %s185 = sphi 0, %s187
      %s188 = sphi 0, %s185
      %s189 = sphi 0, %s188
      %s205 = sphi 0, %s189
      %s211 = sphi 0, %s213
      %s214 = sphi 0, %s211
      %s215 = sphi 0, %s214
      %s231 = sphi 0, %s215
    $region4: #{tpu_custom_call.1} parent=1 // loop_header_branch
      %27 = sbr.rel (%p25) target = $region8
    $region5: #{tpu_custom_call.1} parent=1 // loop_body
      %s29 = ssub.s32 %s24, 1
      %s30 = ssub.s32 %s24, 2
      %s37 = sadd.s32 1, %s32
      %p38 = scmp.ge.s32.totalorder %s37, 5
      %s39 = scalar_select %p38, 0, %s37
      %s40 = sadd.s32 1, %s31
      %s41 = scalar_select %p38, %s40, %s31
      %p42 = scmp.ge.s32.totalorder %s41, 2
      %s43 = scalar_select %p42, 0, %s41
      %s45 = sadd.s32 %s44, 1
      %p48 = scmp.eq.s32.totalorder %s24, 9
      %p49 = scmp.ne.s32.totalorder %s44, %s46
      %p50 = scmp.eq.s32.totalorder %s24, 0
      %p51 = por %p49, %p50
      %p52 = scmp.ne.s32.totalorder %s44, %s46
      %p53 = scmp.eq.s32.totalorder %s29, 9
      %p54 = por %p52, %p53
      %p55 = scmp.ne.s32.totalorder %s46, %s47
      %p56 = scmp.eq.s32.totalorder %s29, 0
      %p57 = por %p55, %p56
      %p58 = scmp.ne.s32.totalorder %s46, %s47
      %p59 = scmp.eq.s32.totalorder %s30, 9
      %p60 = por %p58, %p59
      %p62 = scmp.ne.s32.totalorder %s47, %s61
      %p63 = scmp.eq.s32.totalorder %s30, 0
      %p64 = por %p62, %p63
      %s65 = smul.u32 %s32, 4
      %s66 = sshra.s32 %s32, 7
      %s67 = sand.u32 %s32, 127
      %s68 = sadd.s32 %s66, %s31
      %s69 = smul.u32 %s68, 128
      %s70 = sshra.s32 %s32, 7
      %s71 = sand.u32 %s32, 127
      %s72 = sadd.s32 %s69, %s71
      %s73 = sld [smem:[#allocation6 + %s72]]
      %s74 = sadd.s32 %s65, %s73
      %s75 = smul.u32 %s39, 4
      %s76 = sshra.s32 %s39, 7
      %s77 = sand.u32 %s39, 127
      %s78 = sadd.s32 %s76, %s43
      %s79 = smul.u32 %s78, 128
      %s80 = sshra.s32 %s39, 7
      %s81 = sand.u32 %s39, 127
      %s82 = sadd.s32 %s79, %s81
      %s83 = sld [smem:[#allocation6 + %s82]]
      %s84 = sadd.s32 %s75, %s83
      %s85 = ssub.s32 %s31, %s43
      %s86 = ssub.s32 %s74, %s84
      %s87 = sor.u32 %s85, %s86
      %p88 = scmp.eq.s32.totalorder %s87, 0
      %s90 = sadd.s32 %s89, 1
      %s91 = scalar_select %p88, %s89, %s90
      %p94 = pneg %p88
      %p95 = scmp.eq.s32.totalorder %s24, 9
      %p96 = por %p94, %p95
      %p97 = scmp.ne.s32.totalorder %s89, %s92
      %p98 = scmp.eq.s32.totalorder %s24, 0
      %p99 = por %p97, %p98
      %p100 = scmp.ne.s32.totalorder %s89, %s92
      %p101 = scmp.eq.s32.totalorder %s29, 9
      %p102 = por %p100, %p101
      %p103 = scmp.ne.s32.totalorder %s92, %s93
      %p104 = scmp.eq.s32.totalorder %s29, 0
      %p105 = por %p103, %p104
      %p106 = scmp.ne.s32.totalorder %s92, %s93
      %p107 = scmp.eq.s32.totalorder %s30, 9
      %p108 = por %p106, %p107
      %p110 = scmp.ne.s32.totalorder %s93, %s109
      %p111 = scmp.eq.s32.totalorder %s30, 0
      %p112 = por %p110, %p111
      %s113 = sshra.s32 %s32, 7
      %s114 = sand.u32 %s32, 127
      %s115 = sadd.s32 %s113, %s31
      %s116 = smul.u32 %s115, 128
      %s117 = sshra.s32 %s32, 7
      %s118 = sand.u32 %s32, 127
      %s119 = sadd.s32 %s116, %s118
      %s120 = sld [smem:[#allocation6 + %s119]]
      %s121 = sshra.s32 %s39, 7
      %s122 = sand.u32 %s39, 127
      %s123 = sadd.s32 %s121, %s43
      %s124 = smul.u32 %s123, 128
      %s125 = sshra.s32 %s39, 7
      %s126 = sand.u32 %s39, 127
      %s127 = sadd.s32 %s124, %s126
      %s128 = sld [smem:[#allocation6 + %s127]]
      %s129 = ssub.s32 %s31, %s43
      %s130 = ssub.s32 %s120, %s128
      %s131 = sor.u32 %s129, %s130
      %p132 = scmp.eq.s32.totalorder %s131, 0
      %s134 = sadd.s32 %s133, 1
      %s135 = scalar_select %p132, %s133, %s134
      %p138 = pneg %p132
      %p139 = scmp.eq.s32.totalorder %s24, 9
      %p140 = por %p138, %p139
      %p141 = scmp.ne.s32.totalorder %s133, %s136
      %p142 = scmp.eq.s32.totalorder %s24, 0
      %p143 = por %p141, %p142
      %p144 = scmp.ne.s32.totalorder %s133, %s136
      %p145 = scmp.eq.s32.totalorder %s29, 9
      %p146 = por %p144, %p145
      %p147 = scmp.ne.s32.totalorder %s136, %s137
      %p148 = scmp.eq.s32.totalorder %s29, 0
      %p149 = por %p147, %p148
      %p150 = scmp.ne.s32.totalorder %s136, %s137
      %p151 = scmp.eq.s32.totalorder %s30, 9
      %p152 = por %p150, %p151
      %p154 = scmp.ne.s32.totalorder %s137, %s153
      %p155 = scmp.eq.s32.totalorder %s30, 0
      %p156 = por %p154, %p155
      %s157 = ssub.s32 %s31, %s43
      %p158 = scmp.eq.s32.totalorder %s157, 0
      %s160 = sadd.s32 %s159, 1
      %s161 = scalar_select %p158, %s159, %s160
      %p164 = pneg %p158
      %p165 = scmp.eq.s32.totalorder %s24, 9
      %p166 = por %p164, %p165
      %p167 = scmp.ne.s32.totalorder %s159, %s162
      %p168 = scmp.eq.s32.totalorder %s24, 0
      %p169 = por %p167, %p168
      %p170 = scmp.ne.s32.totalorder %s159, %s162
      %p171 = scmp.eq.s32.totalorder %s29, 9
      %p172 = por %p170, %p171
      %p173 = scmp.ne.s32.totalorder %s162, %s163
      %p174 = scmp.eq.s32.totalorder %s29, 0
      %p175 = por %p173, %p174
      %p176 = scmp.ne.s32.totalorder %s162, %s163
      %p177 = scmp.eq.s32.totalorder %s30, 9
      %p178 = por %p176, %p177
      %p180 = scmp.ne.s32.totalorder %s163, %s179
      %p181 = scmp.eq.s32.totalorder %s30, 0
      %p182 = por %p180, %p181
      %s183 = ssub.s32 %s31, %s43
      %p184 = scmp.eq.s32.totalorder %s183, 0
      %s186 = sadd.s32 %s185, 1
      %s187 = scalar_select %p184, %s185, %s186
      %p190 = pneg %p184
      %p191 = scmp.eq.s32.totalorder %s24, 9
      %p192 = por %p190, %p191
      %p193 = scmp.ne.s32.totalorder %s185, %s188
      %p194 = scmp.eq.s32.totalorder %s24, 0
      %p195 = por %p193, %p194
      %p196 = scmp.ne.s32.totalorder %s185, %s188
      %p197 = scmp.eq.s32.totalorder %s29, 9
      %p198 = por %p196, %p197
      %p199 = scmp.ne.s32.totalorder %s188, %s189
      %p200 = scmp.eq.s32.totalorder %s29, 0
      %p201 = por %p199, %p200
      %p202 = scmp.ne.s32.totalorder %s188, %s189
      %p203 = scmp.eq.s32.totalorder %s30, 9
      %p204 = por %p202, %p203
      %p206 = scmp.ne.s32.totalorder %s189, %s205
      %p207 = scmp.eq.s32.totalorder %s30, 0
      %p208 = por %p206, %p207
      %s209 = ssub.s32 %s31, %s43
      %p210 = scmp.eq.s32.totalorder %s209, 0
      %s212 = sadd.s32 %s211, 1
      %s213 = scalar_select %p210, %s211, %s212
      %p216 = pneg %p210
      %p217 = scmp.eq.s32.totalorder %s24, 9
      %p218 = por %p216, %p217
      %p219 = scmp.ne.s32.totalorder %s211, %s214
      %p220 = scmp.eq.s32.totalorder %s24, 0
      %p221 = por %p219, %p220
      %p222 = scmp.ne.s32.totalorder %s211, %s214
      %p223 = scmp.eq.s32.totalorder %s29, 9
      %p224 = por %p222, %p223
      %p225 = scmp.ne.s32.totalorder %s214, %s215
      %p226 = scmp.eq.s32.totalorder %s29, 0
      %p227 = por %p225, %p226
      %p228 = scmp.ne.s32.totalorder %s214, %s215
      %p229 = scmp.eq.s32.totalorder %s30, 9
      %p230 = por %p228, %p229
      %p232 = scmp.ne.s32.totalorder %s215, %s231
      %p233 = scmp.eq.s32.totalorder %s30, 0
      %p234 = por %p232, %p233
      %p235 = scmp.le.s32.totalorder 1, %s24
      %p236 = scmp.lt.s32.totalorder %s24, 11
      %p237 = pnand %p235, %p236
      %p238 = pneg %p237
      // Predicated region
      $region9: #{tpu_custom_call.1} parent=5 // pred_check
        _
      $region10: #{tpu_custom_call.1} parent=5 // pred_check_branch
        %240 = sbr.rel (%p237) target = $region12
      $region11: #{tpu_custom_call.1} parent=5 // pred_region
        %s241 = ssub.s32 %s24, 1
        // Predicated region
        $region13: #{tpu_custom_call.1} parent=11 // pred_check
          %p242 = pneg %p57
        $region14: #{tpu_custom_call.1} parent=11 // pred_check_branch
          %244 = sbr.rel (%p242) target = $region16
        $region15: #{tpu_custom_call.1} parent=11 // pred_region
          %246 = vsyncadd [#allocation9], 0
          %s248 = sshll.u32 %s1, 4
          %s249 = int_to_ptr.vmem [resolvable:$true] %s248
          %251 = dma.vmem_to_smem %s249, 16, [#allocation7], [#allocation9]
        $region16: #{tpu_custom_call.1} parent=11 // pred_fallthru
          _
      $region12: #{tpu_custom_call.1} parent=5 // pred_fallthru
        _
      %p252 = scmp.lt.s32.totalorder %s24, 10
      // Predicated region
      $region17: #{tpu_custom_call.1} parent=5 // pred_check
        %p253 = pneg %p252
      $region18: #{tpu_custom_call.1} parent=5 // pred_check_branch
        %255 = sbr.rel (%p253) target = $region20
      $region19: #{tpu_custom_call.1} parent=5 // pred_region
        // Predicated region
        $region21: #{tpu_custom_call.1} parent=19 // pred_check
          %p256 = pneg %p99
        $region22: #{tpu_custom_call.1} parent=19 // pred_check_branch
          %258 = sbr.rel (%p256) target = $region24
        $region23: #{tpu_custom_call.1} parent=19 // pred_region
          %s259 = smul.u32 %s32, 4
          %s260 = sshra.s32 %s32, 7
          %s261 = sand.u32 %s32, 127
          %s262 = sadd.s32 %s260, %s31
          %s263 = smul.u32 %s262, 128
          %s264 = sshra.s32 %s32, 7
          %s265 = sand.u32 %s32, 127
          %s266 = sadd.s32 %s263, %s265
          %s267 = sld [smem:[#allocation6 + %s266]]
          %s268 = sadd.s32 %s259, %s267
          %p269 = scmp.lt.s32.totalorder %s31, 1
          %s270 = scalar_select %p269, %s31, 1
          %p271 = scmp.lt.s32.totalorder %s268, 19
          %s272 = scalar_select %p271, %s268, 19
          %s273 = smul.addr %s270, 20
          %s274 = sadd.s32 %s272, %s273
          %s275 = smul.addr %s274, 8
          %s276 = scalar_lea.vmem %s2, %s275
          %s277 = smul.u32 %s32, 4
          %s278 = sshra.s32 %s32, 7
          %s279 = sand.u32 %s32, 127
          %s280 = sadd.s32 %s278, %s31
          %s281 = smul.u32 %s280, 128
          %s282 = sshra.s32 %s32, 7
          %s283 = sand.u32 %s32, 127
          %s284 = sadd.s32 %s281, %s283
          %s285 = sld [smem:[#allocation6 + %s284]]
          %s286 = sadd.s32 %s277, %s285
        $region24: #{tpu_custom_call.1} parent=19 // pred_fallthru
          _
        // Predicated region
        $region25: #{tpu_custom_call.1} parent=19 // pred_check
          %p287 = pneg %p143
        $region26: #{tpu_custom_call.1} parent=19 // pred_check_branch
          %289 = sbr.rel (%p287) target = $region28
        $region27: #{tpu_custom_call.1} parent=19 // pred_region
          %s290 = sshra.s32 %s32, 7
          %s291 = sand.u32 %s32, 127
          %s292 = sadd.s32 %s290, %s31
          %s293 = smul.u32 %s292, 128
          %s294 = sshra.s32 %s32, 7
          %s295 = sand.u32 %s32, 127
          %s296 = sadd.s32 %s293, %s295
          %s297 = sld [smem:[#allocation6 + %s296]]
          %p298 = scmp.lt.s32.totalorder %s31, 1
          %s299 = scalar_select %p298, %s31, 1
          %p300 = scmp.lt.s32.totalorder %s297, 3
          %s301 = scalar_select %p300, %s297, 3
          %s302 = smul.addr %s301, 2
          %s303 = smul.addr %s299, 8
          %s304 = sadd.s32 %s302, %s303
          %s305 = smul.addr %s304, 8
          %s306 = scalar_lea.vmem %s3, %s305
          %s307 = sshra.s32 %s32, 7
          %s308 = sand.u32 %s32, 127
          %s309 = sadd.s32 %s307, %s31
          %s310 = smul.u32 %s309, 128
          %s311 = sshra.s32 %s32, 7
          %s312 = sand.u32 %s32, 127
          %s313 = sadd.s32 %s310, %s312
          %s314 = sld [smem:[#allocation6 + %s313]]
        $region28: #{tpu_custom_call.1} parent=19 // pred_fallthru
          _
        // Predicated region
        $region29: #{tpu_custom_call.1} parent=19 // pred_check
          %p315 = pneg %p169
        $region30: #{tpu_custom_call.1} parent=19 // pred_check_branch
          %317 = sbr.rel (%p315) target = $region32
        $region31: #{tpu_custom_call.1} parent=19 // pred_region
          %p318 = scmp.lt.s32.totalorder %s31, 1
          %s319 = scalar_select %p318, %s31, 1
          %s320 = smul.addr %s319, 6
          %s321 = smul.addr %s320, 8
          %s322 = scalar_lea.vmem %s4, %s321
        $region32: #{tpu_custom_call.1} parent=19 // pred_fallthru
          _
        // Predicated region
        $region33: #{tpu_custom_call.1} parent=19 // pred_check
          %p323 = pneg %p195
        $region34: #{tpu_custom_call.1} parent=19 // pred_check_branch
          %325 = sbr.rel (%p323) target = $region36
        $region35: #{tpu_custom_call.1} parent=19 // pred_region
          %p326 = scmp.lt.s32.totalorder %s31, 1
          %s327 = scalar_select %p326, %s31, 1
          %s328 = smul.addr %s327, 2
          %s329 = smul.addr %s328, 8
          %s330 = scalar_lea.vmem %s5, %s329
        $region36: #{tpu_custom_call.1} parent=19 // pred_fallthru
          _
      $region20: #{tpu_custom_call.1} parent=5 // pred_fallthru
        _
      %p331 = scmp.le.s32.totalorder 1, %s24
      %p332 = scmp.lt.s32.totalorder %s24, 11
      %p333 = pnand %p331, %p332
      %p334 = pneg %p333
      // Predicated region
      $region37: #{tpu_custom_call.1} parent=5 // pred_check
        _
      $region38: #{tpu_custom_call.1} parent=5 // pred_check_branch
        %336 = sbr.rel (%p333) target = $region40
      $region39: #{tpu_custom_call.1} parent=5 // pred_region
        %s337 = ssub.s32 %s24, 1
        // Predicated region
        $region41: #{tpu_custom_call.1} parent=39 // pred_check
          %p338 = pneg %p57
        $region42: #{tpu_custom_call.1} parent=39 // pred_check_branch
          %340 = sbr.rel (%p338) target = $region44
        $region43: #{tpu_custom_call.1} parent=39 // pred_region
          %342 = dma.done [#allocation9], 16
        $region44: #{tpu_custom_call.1} parent=39 // pred_fallthru
          _
        %343 = sfence
        %p344 = pneg %p57
        %p345 = pneg %p54
        %s346 = smul.u32 %s34, 4
        %s347 = sshra.s32 %s34, 7
        %s348 = sand.u32 %s34, 127
        %s349 = sadd.s32 %s347, %s33
        %s350 = smul.u32 %s349, 128
        %s351 = sshra.s32 %s34, 7
        %s352 = sand.u32 %s34, 127
        %s353 = sadd.s32 %s350, %s352
        %s354 = sld [smem:[#allocation6 + %s353]]
        %s355 = sadd.s32 %s346, %s354
        %p356 = scmp.lt.s32.totalorder %s33, 1
        %s357 = scalar_select %p356, %s33, 1
        %p358 = scmp.lt.s32.totalorder %s355, 19
        %s359 = scalar_select %p358, %s355, 19
        %s360 = smul.addr %s357, 20
        %s361 = sadd.s32 %s359, %s360
        %s362 = smul.addr %s361, 8
        %s363 = scalar_lea.vmem %s2, %s362
        %p364 = pneg %p105
        %p365 = pneg %p102
        %s366 = sshra.s32 %s34, 7
        %s367 = sand.u32 %s34, 127
        %s368 = sadd.s32 %s366, %s33
        %s369 = smul.u32 %s368, 128
        %s370 = sshra.s32 %s34, 7
        %s371 = sand.u32 %s34, 127
        %s372 = sadd.s32 %s369, %s371
        %s373 = sld [smem:[#allocation6 + %s372]]
        %p374 = scmp.lt.s32.totalorder %s33, 1
        %s375 = scalar_select %p374, %s33, 1
        %p376 = scmp.lt.s32.totalorder %s373, 3
        %s377 = scalar_select %p376, %s373, 3
        %s378 = smul.addr %s377, 2
        %s379 = smul.addr %s375, 8
        %s380 = sadd.s32 %s378, %s379
        %s381 = smul.addr %s380, 8
        %s382 = scalar_lea.vmem %s3, %s381
        %p383 = pneg %p149
        %p384 = pneg %p146
        %p385 = scmp.lt.s32.totalorder %s33, 1
        %s386 = scalar_select %p385, %s33, 1
        %s387 = smul.addr %s386, 6
        %s388 = smul.addr %s387, 8
        %s389 = scalar_lea.vmem %s4, %s388
        %p390 = pneg %p175
        %p391 = pneg %p172
        %p392 = scmp.lt.s32.totalorder %s33, 1
        %s393 = scalar_select %p392, %s33, 1
        %s394 = smul.addr %s393, 2
        %s395 = smul.addr %s394, 8
        %s396 = scalar_lea.vmem %s5, %s395
        %p397 = pneg %p201
        %p398 = pneg %p198
        %p399 = pneg %p227
        %p400 = pneg %p224
        %s401 = sand.u32 %s214, 1
        %s402 = scalar_lea.sflag [#allocation8], %s401
        %s403 = sand.u32 %s214, 1
        %s404 = smul.addr %s403, 8
        %s405 = scalar_lea.vmem [#allocation10], %s404
        %s406 = smul.u32 %s34, 4
        %s407 = sshra.s32 %s34, 7
        %s408 = sand.u32 %s34, 127
        %s409 = sadd.s32 %s407, %s33
        %s410 = smul.u32 %s409, 128
        %s411 = sshra.s32 %s34, 7
        %s412 = sand.u32 %s34, 127
        %s413 = sadd.s32 %s410, %s412
        %s414 = sld [smem:[#allocation6 + %s413]]
        %s415 = sadd.s32 %s406, %s414
        %p416 = scmp.lt.s32.totalorder %s33, 1
        %s417 = scalar_select %p416, %s33, 1
        %p418 = scmp.lt.s32.totalorder %s415, 19
        %s419 = scalar_select %p418, %s415, 19
        %s420 = smul.addr %s417, 20
        %s421 = sadd.s32 %s419, %s420
        %s422 = smul.addr %s421, 8
        %s423 = scalar_lea.vmem %s2, %s422
        %s424 = smul.u32 %s34, 4
        %s425 = sshra.s32 %s34, 7
        %s426 = sand.u32 %s34, 127
        %s427 = sadd.s32 %s425, %s33
        %s428 = smul.u32 %s427, 128
        %s429 = sshra.s32 %s34, 7
        %s430 = sand.u32 %s34, 127
        %s431 = sadd.s32 %s428, %s430
        %s432 = sld [smem:[#allocation6 + %s431]]
        %s433 = sadd.s32 %s424, %s432
        %s434 = sshra.s32 %s34, 7
        %s435 = sand.u32 %s34, 127
        %s436 = sadd.s32 %s434, %s33
        %s437 = smul.u32 %s436, 128
        %s438 = sshra.s32 %s34, 7
        %s439 = sand.u32 %s34, 127
        %s440 = sadd.s32 %s437, %s439
        %s441 = sld [smem:[#allocation6 + %s440]]
        %p442 = scmp.lt.s32.totalorder %s33, 1
        %s443 = scalar_select %p442, %s33, 1
        %p444 = scmp.lt.s32.totalorder %s441, 3
        %s445 = scalar_select %p444, %s441, 3
        %s446 = smul.addr %s445, 2
        %s447 = smul.addr %s443, 8
        %s448 = sadd.s32 %s446, %s447
        %s449 = smul.addr %s448, 8
        %s450 = scalar_lea.vmem %s3, %s449
        %s451 = sshra.s32 %s34, 7
        %s452 = sand.u32 %s34, 127
        %s453 = sadd.s32 %s451, %s33
        %s454 = smul.u32 %s453, 128
        %s455 = sshra.s32 %s34, 7
        %s456 = sand.u32 %s34, 127
        %s457 = sadd.s32 %s454, %s456
        %s458 = sld [smem:[#allocation6 + %s457]]
        %p459 = scmp.lt.s32.totalorder %s33, 1
        %s460 = scalar_select %p459, %s33, 1
        %s461 = smul.addr %s460, 6
        %s462 = smul.addr %s461, 8
        %s463 = scalar_lea.vmem %s4, %s462
        %p464 = scmp.lt.s32.totalorder %s33, 1
        %s465 = scalar_select %p464, %s33, 1
        %s466 = smul.addr %s465, 2
        %s467 = smul.addr %s466, 8
        %s468 = scalar_lea.vmem %s5, %s467
        %s469 = smul.u32 %s33, 5
        %s470 = sadd.s32 %s469, %s34
        %s471 = smul.u32 %s470, 4
        %s472 = sld [smem:[#allocation7 + %s471]]
        %s473 = sadd.s32 %s471, 1
        %s474 = sld [smem:[#allocation7 + %s473]]
        %s475 = sadd.s32 %s471, 2
        %s476 = sld [smem:[#allocation7 + %s475]]
        %s477 = sadd.s32 %s471, 3
        %s478 = sld [smem:[#allocation7 + %s477]]
        %v479 = vld [vmem:[%s423] sm:$0xff]
        %v480 = vld [vmem:[%s450] sm:$0xff]
        %v481 = vld [vmem:[%s450 + $0x8] sm:$0xff]
        %v482 = vld [vmem:[%s468] sm:$0xff]
        %v483 = vld [vmem:[%s468 + $0x8] sm:$0xff]
        %v484 = vlaneseq
        %v485 = vshrl.u32 %v484, 7
        %v486 = vadd.s32 %v485, 8
        %v487 = vcvt.s32.f32 %v485
        %v488 = vcvt.s32.f32 %v486
        %v489 = vadd.f32 %v487, 0.5
        %v490 = vadd.f32 %v488, 0.5
        %v491 = vlaneseq
        %v492 = vand.u32 %v491, 127
        %v493 = vcvt.s32.f32 %v492
        %v494 = vstv %s474
        %v495 = vsub.f32 %v489, %v494
        %v496 = vsub.f32 %v490, %v494
        %s497 = ssub.f32 %s478, %s474
        %v498 = vstv %s497
        %v499 = vrcp.pop %v498
        %v500 = vmul.f32 %v498, %v499
        %v501 = vsub.f32 1.0, %v500
        %v502 = vmul.f32 %v499, %v501
        %v503 = vadd.f32 %v499, %v502
        %vm504 = vweird.f32 %v498
        %vm505 = vweird.f32 %v499
        %vm506 = vmor %vm504, %vm505
        %v507 = vsel %vm506, %v499, %v503
        %v508 = vand.u32 2147483647, %v498
        %vm509 = vcmp.eq.f32.partialorder %v508, 8.507059e+37
        %v510 = vand.u32 %v498, 2147483648
        %v511 = vor.u32 1.1754944e-38, %v510
        %v512 = vsel %vm509, %v511, %v507
        %v513 = vmul.f32 %v495, %v512
        %v514 = vmul.f32 %v496, %v512
        %v515 = vmul.f32 %v513, 8.0
        %v516 = vmul.f32 %v514, 8.0
        %v517 = vsub.f32 %v515, 0.5
        %v518 = vsub.f32 %v516, 0.5
        %v519 = vsub.f32 %v517, %v493
        %v520 = vsub.f32 %v518, %v493
        %v521 = vand.u32 2147483647, %v519
        %v522 = vand.u32 2147483647, %v520
        %v523 = vsub.f32 1.0, %v521
        %v524 = vsub.f32 1.0, %v522
        %v525 = vmax.f32 %v523, 0.0
        %v526 = vmax.f32 %v524, 0.0
        %v527 = vadd.f32 %v493, 0.5
        %v528 = vstv %s472
        %v529 = vsub.f32 %v527, %v528
        %s530 = ssub.f32 %s476, %s472
        %v531 = vstv %s530
        %v532 = vrcp.pop %v531
        %v533 = vmul.f32 %v531, %v532
        %v534 = vsub.f32 1.0, %v533
        %v535 = vmul.f32 %v532, %v534
        %v536 = vadd.f32 %v532, %v535
        %vm537 = vweird.f32 %v531
        %vm538 = vweird.f32 %v532
        %vm539 = vmor %vm537, %vm538
        %v540 = vsel %vm539, %v532, %v536
        %v541 = vand.u32 2147483647, %v531
        %vm542 = vcmp.eq.f32.partialorder %v541, 8.507059e+37
        %v543 = vand.u32 %v531, 2147483648
        %v544 = vor.u32 1.1754944e-38, %v543
        %v545 = vsel %vm542, %v544, %v540
        %v546 = vmul.f32 %v529, %v545
        %v547 = vmul.f32 %v546, 8.0
        %v548 = vsub.f32 %v547, 0.5
        %v549 = vsub.f32 %v548, %v487
        %v550 = vand.u32 2147483647, %v549
        %v551 = vsub.f32 1.0, %v550
        %v552 = vmax.f32 %v551, 0.0
        %vm553 = vcmask 64512
        %v555 = vsel %vm553, %v525, 0
        %v558 = vsel %vm553, %v526, 0
        %560 = vmatpush.msra.mxu0 0.0
        %561 = vmatpush.msra.mxu0 0.0
        %562 = vmatpush.msra.mxu0 0.0
        %563 = vmatpush.msra.mxu0 0.0
        %564 = vmatpush.msra.mxu0 0.0
        %565 = vmatpush.msra.mxu0 0.0
        %566 = vmatpush.msra.mxu0 0.0
        %567 = vmatpush.msra.mxu0 0.0
        %568 = vmatpush.msra.mxu0 0.0
        %569 = vmatpush.msra.mxu0 0.0
        %570 = vmatpush.msra.mxu0 0.0
        %571 = vmatpush.msra.mxu0 0.0
        %572 = vmatpush.msra.mxu0 0.0
        %573 = vmatpush.msra.mxu0 0.0
        %574 = vmatpush.msra.mxu0 0.0
        %575 = vmatpush.msra.mxu0 %v479
        %576 = vmatmul.f32.gmra.mxu0 %v555
        %v577 = vpop.f32.mrf.mxu0
        %v578 = vadd.f32 0.0, %v577
        %579 = vmatmul.f32.gmra.mxu0 %v558
        %v580 = vpop.f32.mrf.mxu0
        %v581 = vadd.f32 0.0, %v580
        %582 = vdwg.mxu0
        %s583 = scvt.f32.s32 %s474
        %s584 = scvt.s32.f32 %s583
        %s585 = sand.u32 2147483647, %s584
        %s586 = sand.u32 %s474, 2147483648
        %s587 = sor.u32 %s585, %s586
        %s588 = sand.u32 2147483647, %s474
        %p589 = scmp.lt.f32.partialorder %s588, 2.1474836e+09
        %s590 = scalar_select %p589, %s587, %s474
        %v591 = vstv %s590
        %vm592 = vcmp.ge.f32.partialorder %v487, %v591
        %vm593 = vcmp.ge.f32.partialorder %v488, %v591
        %s594 = scvt.f32.s32 %s478
        %s595 = scvt.s32.f32 %s594
        %s596 = sand.u32 2147483647, %s595
        %s597 = sand.u32 %s478, 2147483648
        %s598 = sor.u32 %s596, %s597
        %s599 = sand.u32 2147483647, %s478
        %p600 = scmp.lt.f32.partialorder %s599, 2.1474836e+09
        %s601 = scalar_select %p600, %s598, %s478
        %v602 = vstv %s601
        %vm603 = vcmp.lt.f32.partialorder %v487, %v602
        %vm604 = vcmp.lt.f32.partialorder %v488, %v602
        %vm605 = vmand %vm592, %vm603
        %vm606 = vmand %vm593, %vm604
        %s607 = scvt.f32.s32 %s472
        %s608 = scvt.s32.f32 %s607
        %s609 = sand.u32 2147483647, %s608
        %s610 = sand.u32 %s472, 2147483648
        %s611 = sor.u32 %s609, %s610
        %s612 = sand.u32 2147483647, %s472
        %p613 = scmp.lt.f32.partialorder %s612, 2.1474836e+09
        %s614 = scalar_select %p613, %s611, %s472
        %v615 = vstv %s614
        %vm616 = vcmp.ge.f32.partialorder %v493, %v615
        %vm617 = vmand %vm605, %vm616
        %vm618 = vmand %vm606, %vm616
        %s619 = scvt.f32.s32 %s476
        %s620 = scvt.s32.f32 %s619
        %s621 = sand.u32 2147483647, %s620
        %s622 = sand.u32 %s476, 2147483648
        %s623 = sor.u32 %s621, %s622
        %s624 = sand.u32 2147483647, %s476
        %p625 = scmp.lt.f32.partialorder %s624, 2.1474836e+09
        %s626 = scalar_select %p625, %s623, %s476
        %v627 = vstv %s626
        %vm628 = vcmp.lt.f32.partialorder %v493, %v627
        %vm629 = vmand %vm617, %vm628
        %vm630 = vmand %vm618, %vm628
        %v631 = vsel %vm629, %v480, 0.0
        %v632 = vsel %vm630, %v481, 0.0
        %v634 = vsel %vm553, %v578, 0
        %v637 = vsel %vm553, %v581, 0
        %639 = vmatpush.msra.mxu0 0.0
        %640 = vmatpush.msra.mxu0 0.0
        %641 = vmatpush.msra.mxu0 0.0
        %642 = vmatpush.msra.mxu0 0.0
        %643 = vmatpush.msra.mxu0 0.0
        %644 = vmatpush.msra.mxu0 0.0
        %645 = vmatpush.msra.mxu0 0.0
        %646 = vmatpush.msra.mxu0 0.0
        %647 = vmatpush.msra.mxu0 0.0
        %648 = vmatpush.msra.mxu0 0.0
        %649 = vmatpush.msra.mxu0 0.0
        %650 = vmatpush.msra.mxu0 0.0
        %651 = vmatpush.msra.mxu0 0.0
        %652 = vmatpush.msra.mxu0 0.0
        %653 = vmatpush.msra.mxu0 0.0
        %654 = vmatpush.msra.mxu0 %v552
        %655 = vmatmul.f32.gmra.mxu0 %v634
        %v656 = vpop.f32.mrf.mxu0
        %v657 = vadd.f32 %v631, %v656
        %658 = vmatmul.f32.gmra.mxu0 %v637
        %v659 = vpop.f32.mrf.mxu0
        %v660 = vadd.f32 %v632, %v659
        %661 = vdwg.mxu0
        %p662 = scmp.eq.s32.totalorder %s34, 0
        // Predicated region
        $region45: #{tpu_custom_call.1} parent=39 // pred_check
          %p663 = pneg %p662
        $region46: #{tpu_custom_call.1} parent=39 // pred_check_branch
          %665 = sbr.rel (%p663) target = $region48
        $region47: #{tpu_custom_call.1} parent=39 // pred_region
          %v666 = vld [vmem:[%s463] sm:$0xff]
          %v667 = vld [vmem:[%s463 + $0x8] sm:$0xff]
          %vm668 = vcmp.eq.s32.totalorder %v482, 0
          %vm669 = vcmp.eq.s32.totalorder %v483, 0
          %v670 = vsel %vm668, %v666, 0.0
          %v671 = vsel %vm669, %v667, 0.0
          %s672 = scalar_lea.vmem %s463, 16
          %v673 = vld [vmem:[%s672] sm:$0xff]
          %v674 = vld [vmem:[%s672 + $0x8] sm:$0xff]
          %v675 = vmax.f32 %v666, %v673
          %v676 = vmax.f32 %v667, %v674
          %vm677 = vcmp.eq.s32.totalorder %v482, 1
          %vm678 = vcmp.eq.s32.totalorder %v483, 1
          %v679 = vsel %vm677, %v673, 0.0
          %v680 = vsel %vm678, %v674, 0.0
          %v681 = vadd.f32 %v670, %v679
          %v682 = vadd.f32 %v671, %v680
          %s683 = scalar_lea.vmem %s463, 32
          %v684 = vld [vmem:[%s683] sm:$0xff]
          %v685 = vld [vmem:[%s683 + $0x8] sm:$0xff]
          %v686 = vmax.f32 %v675, %v684
          %v687 = vmax.f32 %v676, %v685
          %vm688 = vcmp.eq.s32.totalorder %v482, 2
          %vm689 = vcmp.eq.s32.totalorder %v483, 2
          %v690 = vsel %vm688, %v684, 0.0
          %v691 = vsel %vm689, %v685, 0.0
          %v692 = vadd.f32 %v681, %v690
          %v693 = vadd.f32 %v682, %v691
          %v694 = vsub.f32 %v666, %v686
          %v695 = vsub.f32 %v667, %v687
          %v696 = vmul.f32 %v694, 1.442695
          %v697 = vpow.pop %v696
          %v698 = vmul.f32 %v695, 1.442695
          %v699 = vpow.pop %v698
          %v700 = vsub.f32 %v673, %v686
          %v701 = vsub.f32 %v674, %v687
          %v702 = vmul.f32 %v700, 1.442695
          %v703 = vpow.pop %v702
          %v704 = vmul.f32 %v701, 1.442695
          %v705 = vpow.pop %v704
          %v706 = vadd.f32 %v697, %v703
          %v707 = vadd.f32 %v699, %v705
          %v708 = vsub.f32 %v684, %v686
          %v709 = vsub.f32 %v685, %v687
          %v710 = vmul.f32 %v708, 1.442695
          %v711 = vpow.pop %v710
          %v712 = vmul.f32 %v709, 1.442695
          %v713 = vpow.pop %v712
          %v714 = vadd.f32 %v706, %v711
          %v715 = vadd.f32 %v707, %v713
          %vm716 = vcmask 130048
          %717 = vst.msk [vmem:[#allocation2] sm:$0xff] %vm716, %v686
          %718 = vst.msk [vmem:[#allocation2 + $0x8] sm:$0xff] %vm716, %v687
          %719 = vst.msk [vmem:[#allocation3] sm:$0xff] %vm716, %v714
          %720 = vst.msk [vmem:[#allocation3 + $0x8] sm:$0xff] %vm716, %v715
          %721 = vst.msk [vmem:[#allocation4] sm:$0xff] %vm716, %v692
          %722 = vst.msk [vmem:[#allocation4 + $0x8] sm:$0xff] %vm716, %v693
        $region48: #{tpu_custom_call.1} parent=39 // pred_fallthru
          _
        %v723 = vld [vmem:[#allocation2] sm:$0xff]
        %v724 = vld [vmem:[#allocation2 + $0x8] sm:$0xff]
        %v725 = vmax.f32 %v723, %v657
        %v726 = vmax.f32 %v724, %v660
        %v727 = vld [vmem:[#allocation3] sm:$0xff]
        %v728 = vld [vmem:[#allocation3 + $0x8] sm:$0xff]
        %v729 = vsub.f32 %v723, %v725
        %v730 = vsub.f32 %v724, %v726
        %v731 = vmul.f32 %v729, 1.442695
        %v732 = vpow.pop %v731
        %v733 = vmul.f32 %v730, 1.442695
        %v734 = vpow.pop %v733
        %v735 = vmul.f32 %v727, %v732
        %v736 = vmul.f32 %v728, %v734
        %v737 = vsub.f32 %v657, %v725
        %v738 = vsub.f32 %v660, %v726
        %v739 = vmul.f32 %v737, 1.442695
        %v740 = vpow.pop %v739
        %v741 = vmul.f32 %v738, 1.442695
        %v742 = vpow.pop %v741
        %v743 = vadd.f32 %v735, %v740
        %v744 = vadd.f32 %v736, %v742
        %vm745 = vcmask 130048
        %746 = vst.msk [vmem:[#allocation3] sm:$0xff] %vm745, %v743
        %747 = vst.msk [vmem:[#allocation3 + $0x8] sm:$0xff] %vm745, %v744
        %v748 = vld [vmem:[#allocation4] sm:$0xff]
        %v749 = vld [vmem:[#allocation4 + $0x8] sm:$0xff]
        %s750 = sadd.s32 %s34, 3
        %v751 = vstv %s750
        %vm752 = vcmp.eq.s32.totalorder %v482, %v751
        %vm753 = vcmp.eq.s32.totalorder %v483, %v751
        %v754 = vsel %vm752, %v657, 0.0
        %v755 = vsel %vm753, %v660, 0.0
        %v756 = vadd.f32 %v748, %v754
        %v757 = vadd.f32 %v749, %v755
        %758 = vst.msk [vmem:[#allocation4] sm:$0xff] %vm745, %v756
        %759 = vst.msk [vmem:[#allocation4 + $0x8] sm:$0xff] %vm745, %v757
        %760 = vst.msk [vmem:[#allocation2] sm:$0xff] %vm745, %v725
        %761 = vst.msk [vmem:[#allocation2 + $0x8] sm:$0xff] %vm745, %v726
        %p762 = scmp.eq.s32.totalorder %s34, 4
        // Predicated region
        $region49: #{tpu_custom_call.1} parent=39 // pred_check
          %p763 = pneg %p762
        $region50: #{tpu_custom_call.1} parent=39 // pred_check_branch
          %765 = sbr.rel (%p763) target = $region52
        $region51: #{tpu_custom_call.1} parent=39 // pred_region
          %vm766 = vcmp.ne.s32.totalorder %v482, 255
          %vm767 = vcmp.ne.s32.totalorder %v483, 255
          %v768 = vld [vmem:[#allocation2] sm:$0xff]
          %v769 = vld [vmem:[#allocation2 + $0x8] sm:$0xff]
          %v770 = vld [vmem:[#allocation3] sm:$0xff]
          %v771 = vld [vmem:[#allocation3 + $0x8] sm:$0xff]
          %v772 = vlog2.pop %v770
          %v773 = vmul.f32 %v772, 0.6931472
          %v774 = vlog2.pop %v771
          %v775 = vmul.f32 %v774, 0.6931472
          %v776 = vadd.f32 %v768, %v773
          %v777 = vadd.f32 %v769, %v775
          %v778 = vld [vmem:[#allocation4] sm:$0xff]
          %v779 = vld [vmem:[#allocation4 + $0x8] sm:$0xff]
          %v780 = vsub.f32 %v776, %v778
          %v781 = vsub.f32 %v777, %v779
          %v782 = vsel %vm766, %v780, 0.0
          %v783 = vsel %vm767, %v781, 0.0
          %v784 = vsel %vm745, %v782, 0.0
          %v785 = vsel %vm745, %v783, 0.0
          %v786 = vadd.f32 %v784, %v785
          %787 = vadd.xlane.f32.xlu0 %v786
          %v788 = vpop.xlane.xlu0 %787
          %v789 = vrot.slane %v788, 4
          %v790 = vadd.f32 %v788, %v789
          %v791 = vrot.slane %v790, 2
          %v792 = vadd.f32 %v790, %v791
          %v793 = vrot.slane %v792, 1
          %v794 = vadd.f32 %v792, %v793
          %s795 = vtos %v794
          %v796 = vstv %s795
          %797 = vst [vmem:[%s405] sm:$0xff] %v796
        $region52: #{tpu_custom_call.1} parent=39 // pred_fallthru
          _
        %s798 = sand.u32 %s214, 1
        %s799 = scalar_lea.sflag [#allocation8], %s798
        %s800 = sand.u32 %s214, 1
        %s801 = smul.addr %s800, 8
        %s802 = scalar_lea.vmem [#allocation10], %s801
        // Predicated region
        $region53: #{tpu_custom_call.1} parent=39 // pred_check
          %p803 = pneg %p224
        $region54: #{tpu_custom_call.1} parent=39 // pred_check_branch
          %805 = sbr.rel (%p803) target = $region56
        $region55: #{tpu_custom_call.1} parent=39 // pred_region
          %807 = vsyncadd %s799, 0
          %s808 = smul.addr %s33, 8
          %s809 = scalar_lea.hbm %s6, %s808
          %s811 = sshll.u32 %s802, 4
          %s812 = int_to_ptr.vmem [resolvable:$true] %s811
          %s813 = sshll.u32 %s809, 4
          %s814 = int_to_ptr.hbm [resolvable:$true] %s813
          %816 = dma.vmem_to_hbm [thread:$0]  %s812, 128, %s814, %s799
        $region56: #{tpu_custom_call.1} parent=39 // pred_fallthru
          _
      $region40: #{tpu_custom_call.1} parent=5 // pred_fallthru
        _
      %p817 = scmp.le.s32.totalorder 2, %s24
      // Predicated region
      $region57: #{tpu_custom_call.1} parent=5 // pred_check
        %p818 = pneg %p817
      $region58: #{tpu_custom_call.1} parent=5 // pred_check_branch
        %820 = sbr.rel (%p818) target = $region60
      $region59: #{tpu_custom_call.1} parent=5 // pred_region
        %s821 = ssub.s32 %s24, 2
        // Predicated region
        $region61: #{tpu_custom_call.1} parent=59 // pred_check
          %p822 = pneg %p230
        $region62: #{tpu_custom_call.1} parent=59 // pred_check_branch
          %824 = sbr.rel (%p822) target = $region64
        $region63: #{tpu_custom_call.1} parent=59 // pred_region
          %s825 = sand.u32 %s215, 1
          %s826 = scalar_lea.sflag [#allocation8], %s825
          %s827 = sand.u32 %s215, 1
          %s828 = smul.addr %s827, 8
          %s829 = scalar_lea.vmem [#allocation10], %s828
          %831 = dma.done %s826, 128
        $region64: #{tpu_custom_call.1} parent=59 // pred_fallthru
          _
      $region60: #{tpu_custom_call.1} parent=5 // pred_fallthru
        _
    $region6: #{tpu_custom_call.1} parent=1 // loop_footer
      %s28 = sadd.s32 1, %s24
    $region7: #{tpu_custom_call.1} parent=1 // loop_footer_branch
      %23 = sbr.rel target = $region3
    $region8: #{tpu_custom_call.1} parent=1 // loop_exit
      _
    %832 = vsyncpa [#allocation8], 1
    %s833 = scalar_lea.sflag [#allocation8], 1
    %834 = vsyncpa %s833, 1
    %835 = vsyncpa [#allocation9], 1
    %s836 = scalar_lea.sflag [#allocation9], 1
    %837 = vsyncpa %s836, 1

</llo_original>
